<compile_context>
chip_gen: v7x
topology: tpu7x:2x2x1
jax: 0.10.0
libtpu: 0.0.40
codegen_flags: <defaults>
</compile_context>

<pallas_src>
import jax
import jax.numpy as jnp
from jax.experimental import pallas as pl
from jax.experimental.pallas import tpu as pltpu


# ---------------------------------------------------------------------------
# Kernel: channels-last block, both Sobel filters + abs + add fused in one pass
# ---------------------------------------------------------------------------
def _sobel_kernel(x_ref, o_ref):
    # x_ref: (1, oh+2, W, C)   o_ref: (1, oh, ow, C)   with ow = W - 2.
    oh = o_ref.shape[1]
    ow = o_ref.shape[2]

    def win(dh, dw):
        # Shifted (oh, ow, C) window loaded straight from the ref.  C sits on
        # lanes, W on sublanes, so the +-1 shifts never touch the lane axis.
        # Accumulate in f32 even if the input is ever bf16.
        return x_ref[0, pl.ds(dh, oh), pl.ds(dw, ow), :].astype(jnp.float32)

    x00 = win(0, 0); x01 = win(0, 1); x02 = win(0, 2)
    x10 = win(1, 0);                  x12 = win(1, 2)
    x20 = win(2, 0); x21 = win(2, 1); x22 = win(2, 2)

    # Sobel-X: [[-1,0,1],[-2,0,2],[-1,0,1]]  (cross-correlation)
    gx = (x02 - x00) + 2.0 * (x12 - x10) + (x22 - x20)
    # Sobel-Y: [[1,2,1],[0,0,0],[-1,-2,-1]]
    gy = (x00 - x20) + 2.0 * (x01 - x21) + (x02 - x22)

    o_ref[0] = (jnp.abs(gx) + jnp.abs(gy)).astype(o_ref.dtype)


# ---------------------------------------------------------------------------
# Helpers
# ---------------------------------------------------------------------------
def _vmem_limit_bytes():
    """Scoped-VMEM budget: half of physical VMEM, capped at 96 MiB.
    -> ~32 MiB on v7x (64 MiB phys), 64 MiB on v5e/v6e (128 MiB phys)."""
    try:
        cap = int(pltpu.get_tpu_info().vmem_capacity_bytes)
    except Exception:
        cap = 64 * 1024 * 1024  # conservative fallback (v7x-sized)
    return int(min(cap // 2, 96 * 1024 * 1024))


def _choose_h_tile(H, W, C, vmem_limit):
    """Pick an output-row tile `th` (divisor of H-2).  th == H-2 means the whole
    image fits in one grid step; otherwise tile H with a 2-row halo."""
    oh = H - 2

    def footprint(th):
        # ~5-6x the input block: double-buffered input + output + temporaries.
        return 6 * (th + 2) * W * C * 4

    if footprint(oh) <= vmem_limit:
        return oh
    for th in range(oh, 0, -1):
        if oh % th == 0 and footprint(th) <= vmem_limit:
            return th
    return 1  # TODO(synk): tile W too if even a single-row slab overflows VMEM


def _pick_pack(N, C):
    """Smallest group of images to fold into the channel axis so the lane
    axis (pack*C) is a multiple of 128 (lane-dense, unmasked stores)."""
    if C % 128 == 0:
        return 1
    for p in range(1, N + 1):
        if N % p == 0 and (p * C) % 128 == 0:
            return p
    return 1


# ---------------------------------------------------------------------------
# Channels-last entry point (zero transposes for NHWC producers/consumers)
# ---------------------------------------------------------------------------
def gradient_sobel_nhwc(x):
    """x: (B, H, W, C) channels-last. Returns (B, H-2, W-2, C) = |Gx| + |Gy|."""
    B, H, W, C = x.shape
    oh, ow = H - 2, W - 2

    vmem_limit = _vmem_limit_bytes()
    th = _choose_h_tile(H, W, C, vmem_limit)
    n_h = oh // th

    if n_h == 1:
        # Whole image per grid step (small images: ~0.35 us/step amortized over
        # the full H*W*C payload; single HBM read of x, single write of out).
        grid = (B,)
        dims = ("parallel",)
        in_spec = pl.BlockSpec((1, H, W, C), lambda b: (b, 0, 0, 0))
        out_spec = pl.BlockSpec((1, oh, ow, C), lambda b: (b, 0, 0, 0))
    else:
        # H tiling with a 2-row halo: input H dim uses element-offset indexing
        # (overlapping windows of th+2 rows), output H dim is plain blocks of
        # th rows.  Both grid axes are independent -> "parallel" (v7x 2 TCs).
        grid = (B, n_h)
        dims = ("parallel", "parallel")
        in_spec = pl.BlockSpec(
            (1, pl.Element(th + 2), W, C),
            lambda b, h: (b, h * th, 0, 0),
        )
        out_spec = pl.BlockSpec((1, th, ow, C), lambda b, h: (b, h, 0, 0))

    in_bytes = B * H * W * C * x.dtype.itemsize
    out_bytes = B * oh * ow * C * x.dtype.itemsize

    return pl.pallas_call(
        _sobel_kernel,
        out_shape=jax.ShapeDtypeStruct((B, oh, ow, C), x.dtype),
        grid=grid,
        in_specs=[in_spec],
        out_specs=out_spec,
        compiler_params=pltpu.CompilerParams(
            dimension_semantics=dims,
            vmem_limit_bytes=vmem_limit,
        ),
        cost_estimate=pl.CostEstimate(
            flops=11 * B * oh * ow * C,
            transcendentals=0,
            bytes_accessed=in_bytes + out_bytes,
        ),
    )(x)


# ---------------------------------------------------------------------------
# NCHW entry point matching the PyTorch module interface
# ---------------------------------------------------------------------------
def gradient_sobel(x):
    """|Sobel_x(x)| + |Sobel_y(x)|, depthwise, valid padding. x: (N,C,H,W)."""
    N, C, H, W = x.shape
    pack = _pick_pack(N, C)
    n_pack = N // pack

    # Single relayout pass on each side, fused with the channel packing:
    #   (N, C, H, W) -> (n_pack, pack*C, H, W) -> (n_pack, H, W, pack*C)
    # The stencil is per-channel, so folding images into channels is exact.
    x_nhwc = jnp.transpose(x.reshape(n_pack, pack * C, H, W), (0, 2, 3, 1))

    out_nhwc = gradient_sobel_nhwc(x_nhwc)          # (n_pack, H-2, W-2, pack*C)

    out = jnp.transpose(out_nhwc, (0, 3, 1, 2)).reshape(N, C, H - 2, W - 2)
    return out


# ---------------------------------------------------------------------------
# Demo / self-check
# ---------------------------------------------------------------------------
if __name__ == "__main__":
    key = jax.random.PRNGKey(0)
    N, C, H, W = 2, 64, 16, 16          # channels=64 is the module's default
    x = jax.random.normal(key, (N, C, H, W), dtype=jnp.float32)

    fn = jax.jit(gradient_sobel)
    out = jax.block_until_ready(fn(x))

    # Independent reference: direct NCHW stencil (no packing / relayout path).
    gx = ((x[..., :-2, 2:] - x[..., :-2, :-2])
          + 2.0 * (x[..., 1:-1, 2:] - x[..., 1:-1, :-2])
          + (x[..., 2:, 2:] - x[..., 2:, :-2]))
    gy = ((x[..., :-2, :-2] + 2.0 * x[..., :-2, 1:-1] + x[..., :-2, 2:])
          - (x[..., 2:, :-2] + 2.0 * x[..., 2:, 1:-1] + x[..., 2:, 2:]))
    ref = jnp.abs(gx) + jnp.abs(gy)

    assert out.shape == (N, C, H - 2, W - 2), out.shape
    assert jnp.allclose(out, ref, atol=1e-4, rtol=1e-4), \
        float(jnp.max(jnp.abs(out - ref)))

    print("KERNEL_OK")
</pallas_src>

<mosaic_0001>
module attributes {stable_mosaic.version = 11 : i64} {
  func.func @_sobel_kernel(%arg0: i32, %arg1: memref<1x16x16x128xf32, #tpu.memory_space<vmem>>, %arg2: memref<1x14x14x128xf32, #tpu.memory_space<vmem>>) attributes {dimension_semantics = [#tpu.dimension_semantics<parallel>], iteration_bounds = array<i64: 1>, scalar_prefetch = 0 : i64, scratch_operands = 0 : i64, tpu.core_type = #tpu.core_type<tc>, window_params = [{transform_indices = @transform_0, window_bounds = array<i64: 1, 16, 16, 128>}, {transform_indices = @transform_1, window_bounds = array<i64: 1, 14, 14, 128>}]} {
    %c0 = arith.constant 0 : index
    %c0_0 = arith.constant 0 : index
    %c0_1 = arith.constant 0 : index
    %c0_2 = arith.constant 0 : index
    %0 = vector.load %arg1[%c0, %c0_0, %c0_1, %c0_2] : memref<1x16x16x128xf32, #tpu.memory_space<vmem>>, vector<1x14x14x128xf32>
    %1 = vector.shape_cast %0 : vector<1x14x14x128xf32> to vector<14x14x128xf32>
    %c0_3 = arith.constant 0 : index
    %c0_4 = arith.constant 0 : index
    %c1 = arith.constant 1 : index
    %c0_5 = arith.constant 0 : index
    %2 = vector.load %arg1[%c0_3, %c0_4, %c1, %c0_5] : memref<1x16x16x128xf32, #tpu.memory_space<vmem>>, vector<1x14x14x128xf32>
    %3 = vector.shape_cast %2 : vector<1x14x14x128xf32> to vector<14x14x128xf32>
    %c0_6 = arith.constant 0 : index
    %c0_7 = arith.constant 0 : index
    %c2 = arith.constant 2 : index
    %c0_8 = arith.constant 0 : index
    %4 = vector.load %arg1[%c0_6, %c0_7, %c2, %c0_8] : memref<1x16x16x128xf32, #tpu.memory_space<vmem>>, vector<1x14x14x128xf32>
    %5 = vector.shape_cast %4 : vector<1x14x14x128xf32> to vector<14x14x128xf32>
    %c0_9 = arith.constant 0 : index
    %c1_10 = arith.constant 1 : index
    %c0_11 = arith.constant 0 : index
    %c0_12 = arith.constant 0 : index
    %6 = vector.load %arg1[%c0_9, %c1_10, %c0_11, %c0_12] : memref<1x16x16x128xf32, #tpu.memory_space<vmem>>, vector<1x14x14x128xf32>
    %7 = vector.shape_cast %6 : vector<1x14x14x128xf32> to vector<14x14x128xf32>
    %c0_13 = arith.constant 0 : index
    %c1_14 = arith.constant 1 : index
    %c2_15 = arith.constant 2 : index
    %c0_16 = arith.constant 0 : index
    %8 = vector.load %arg1[%c0_13, %c1_14, %c2_15, %c0_16] : memref<1x16x16x128xf32, #tpu.memory_space<vmem>>, vector<1x14x14x128xf32>
    %9 = vector.shape_cast %8 : vector<1x14x14x128xf32> to vector<14x14x128xf32>
    %c0_17 = arith.constant 0 : index
    %c2_18 = arith.constant 2 : index
    %c0_19 = arith.constant 0 : index
    %c0_20 = arith.constant 0 : index
    %10 = vector.load %arg1[%c0_17, %c2_18, %c0_19, %c0_20] : memref<1x16x16x128xf32, #tpu.memory_space<vmem>>, vector<1x14x14x128xf32>
    %11 = vector.shape_cast %10 : vector<1x14x14x128xf32> to vector<14x14x128xf32>
    %c0_21 = arith.constant 0 : index
    %c2_22 = arith.constant 2 : index
    %c1_23 = arith.constant 1 : index
    %c0_24 = arith.constant 0 : index
    %12 = vector.load %arg1[%c0_21, %c2_22, %c1_23, %c0_24] : memref<1x16x16x128xf32, #tpu.memory_space<vmem>>, vector<1x14x14x128xf32>
    %13 = vector.shape_cast %12 : vector<1x14x14x128xf32> to vector<14x14x128xf32>
    %c0_25 = arith.constant 0 : index
    %c2_26 = arith.constant 2 : index
    %c2_27 = arith.constant 2 : index
    %c0_28 = arith.constant 0 : index
    %14 = vector.load %arg1[%c0_25, %c2_26, %c2_27, %c0_28] : memref<1x16x16x128xf32, #tpu.memory_space<vmem>>, vector<1x14x14x128xf32>
    %15 = vector.shape_cast %14 : vector<1x14x14x128xf32> to vector<14x14x128xf32>
    %16 = arith.subf %5, %1 : vector<14x14x128xf32>
    %17 = arith.subf %9, %7 : vector<14x14x128xf32>
    %cst = arith.constant 2.000000e+00 : f32
    %18 = vector.broadcast %cst : f32 to vector<14x14x128xf32>
    %19 = arith.mulf %18, %17 : vector<14x14x128xf32>
    %20 = arith.addf %16, %19 : vector<14x14x128xf32>
    %21 = arith.subf %15, %11 : vector<14x14x128xf32>
    %22 = arith.addf %20, %21 : vector<14x14x128xf32>
    %23 = arith.subf %1, %11 : vector<14x14x128xf32>
    %24 = arith.subf %3, %13 : vector<14x14x128xf32>
    %cst_29 = arith.constant 2.000000e+00 : f32
    %25 = vector.broadcast %cst_29 : f32 to vector<14x14x128xf32>
    %26 = arith.mulf %25, %24 : vector<14x14x128xf32>
    %27 = arith.addf %23, %26 : vector<14x14x128xf32>
    %28 = arith.subf %5, %15 : vector<14x14x128xf32>
    %29 = arith.addf %27, %28 : vector<14x14x128xf32>
    %30 = math.absf %22 : vector<14x14x128xf32>
    %31 = math.absf %29 : vector<14x14x128xf32>
    %32 = arith.addf %30, %31 : vector<14x14x128xf32>
    %c0_30 = arith.constant 0 : index
    %c0_31 = arith.constant 0 : index
    %c0_32 = arith.constant 0 : index
    %c0_33 = arith.constant 0 : index
    %33 = vector.load %arg2[%c0_30, %c0_31, %c0_32, %c0_33] : memref<1x14x14x128xf32, #tpu.memory_space<vmem>>, vector<1x14x14x128xf32>
    %34 = vector.shape_cast %33 : vector<1x14x14x128xf32> to vector<14x14x128xf32>
    %35 = vector.shape_cast %32 : vector<14x14x128xf32> to vector<1x14x14x128xf32>
    tpu.vector_store %arg2[%c0_30, %c0_31, %c0_32, %c0_33], %35 {strides = array<i32>} : memref<1x14x14x128xf32, #tpu.memory_space<vmem>>, vector<1x14x14x128xf32>,
    return
  }
  func.func @transform_0(%arg0: i32) -> (i32, i32, i32, i32) {
    %c0_i32 = arith.constant 0 : i32
    %c0_i32_0 = arith.constant 0 : i32
    %c0_i32_1 = arith.constant 0 : i32
    %c0_i32_2 = arith.constant 0 : i32
    return %arg0, %c0_i32, %c0_i32_0, %c0_i32_1 : i32, i32, i32, i32
  }
  func.func @transform_1(%arg0: i32) -> (i32, i32, i32, i32) {
    %c0_i32 = arith.constant 0 : i32
    %c0_i32_0 = arith.constant 0 : i32
    %c0_i32_1 = arith.constant 0 : i32
    %c0_i32_2 = arith.constant 0 : i32
    return %arg0, %c0_i32, %c0_i32_0, %c0_i32_1 : i32, i32, i32, i32
  }
}

</mosaic_0001>

<llo_original>
// kernel: gradient_sobel.1
$region0: #{gradient_sobel.1}
  #allocation0 [shape = 'u32[]', space=smem, size = 0x4, offset = 0x4, fixed_abs, tag = 'smem constant byte address 0x4 - core index']
  #allocation1 [shape = 'u32[144,128]{1,0:T(1,128)}', space=vmem, size = 0x12000, scoped, tag = 'internal scratch']
  %s0 = inlined_call_operand.vmem [shape: f32[1,16,16,128], index: 0, kind: input, shape index: {}]
  %s1 = inlined_call_operand.vmem [shape: f32[1,14,14,128], index: 1, kind: output, shape index: {}]
  %s2 = sld [smem:[#allocation0]]
  $region14: #{gradient_sobel.1} parent=0
    _
  %s4 = ssub.s32 1, %s2
  %s5 = scalar_select 0, %s4, %s2
  // Predicated region
  $region2: #{gradient_sobel.1} parent=0 // pred_check
    _
  $region3: #{gradient_sobel.1} parent=0 // pred_check_branch
    %7 = sbr.rel (0) target = $region5
  $region4: #{gradient_sobel.1} parent=0 // pred_region
    _
  $region5: #{gradient_sobel.1} parent=0 // pred_fallthru
    _
  %v8 = vld [vmem:[%s0] sm:$0xff]
  %v9 = vld [vmem:[%s0 + $0x8] sm:$0x3f]
  %v10 = vld [vmem:[%s0 + $0x10] sm:$0xff]
  %v11 = vld [vmem:[%s0 + $0x18] sm:$0x3f]
  %v12 = vld [vmem:[%s0 + $0x20] sm:$0xff]
  %v13 = vld [vmem:[%s0 + $0x28] sm:$0x3f]
  %v14 = vld [vmem:[%s0 + $0x30] sm:$0xff]
  %v15 = vld [vmem:[%s0 + $0x38] sm:$0x3f]
  %v16 = vld [vmem:[%s0 + $0x40] sm:$0xff]
  %v17 = vld [vmem:[%s0 + $0x48] sm:$0x3f]
  %v18 = vld [vmem:[%s0 + $0x50] sm:$0xff]
  %v19 = vld [vmem:[%s0 + $0x58] sm:$0x3f]
  %v20 = vld [vmem:[%s0 + $0x60] sm:$0xff]
  %v21 = vld [vmem:[%s0 + $0x68] sm:$0x3f]
  %v22 = vld [vmem:[%s0 + $0x70] sm:$0xff]
  %v23 = vld [vmem:[%s0 + $0x78] sm:$0x3f]
  %v24 = vld [vmem:[%s0 + $0x80] sm:$0xff]
  %v25 = vld [vmem:[%s0 + $0x88] sm:$0x3f]
  %v26 = vld [vmem:[%s0 + $0x90] sm:$0xff]
  %v27 = vld [vmem:[%s0 + $0x98] sm:$0x3f]
  %v28 = vld [vmem:[%s0 + $0xa0] sm:$0xff]
  %v29 = vld [vmem:[%s0 + $0xa8] sm:$0x3f]
  %v30 = vld [vmem:[%s0 + $0xb0] sm:$0xff]
  %v31 = vld [vmem:[%s0 + $0xb8] sm:$0x3f]
  %v32 = vld [vmem:[%s0 + $0xc0] sm:$0xff]
  %v33 = vld [vmem:[%s0 + $0xc8] sm:$0x3f]
  %v34 = vld [vmem:[%s0 + $0xd0] sm:$0xff]
  %v35 = vld [vmem:[%s0 + $0xd8] sm:$0x3f]
  %v36 = vld [vmem:[%s0 + $0x1] sm:$0xff]
  %v37 = vld [vmem:[%s0 + $0x9] sm:$0x3f]
  %v38 = vld [vmem:[%s0 + $0x11] sm:$0xff]
  %v39 = vld [vmem:[%s0 + $0x19] sm:$0x3f]
  %v40 = vld [vmem:[%s0 + $0x21] sm:$0xff]
  %v41 = vld [vmem:[%s0 + $0x29] sm:$0x3f]
  %v42 = vld [vmem:[%s0 + $0x31] sm:$0xff]
  %v43 = vld [vmem:[%s0 + $0x39] sm:$0x3f]
  %v44 = vld [vmem:[%s0 + $0x41] sm:$0xff]
  %v45 = vld [vmem:[%s0 + $0x49] sm:$0x3f]
  %v46 = vld [vmem:[%s0 + $0x51] sm:$0xff]
  %v47 = vld [vmem:[%s0 + $0x59] sm:$0x3f]
  %v48 = vld [vmem:[%s0 + $0x61] sm:$0xff]
  %v49 = vld [vmem:[%s0 + $0x69] sm:$0x3f]
  %v50 = vld [vmem:[%s0 + $0x71] sm:$0xff]
  %v51 = vld [vmem:[%s0 + $0x79] sm:$0x3f]
  %v52 = vld [vmem:[%s0 + $0x81] sm:$0xff]
  %v53 = vld [vmem:[%s0 + $0x89] sm:$0x3f]
  %v54 = vld [vmem:[%s0 + $0x91] sm:$0xff]
  %v55 = vld [vmem:[%s0 + $0x99] sm:$0x3f]
  %v56 = vld [vmem:[%s0 + $0xa1] sm:$0xff]
  %v57 = vld [vmem:[%s0 + $0xa9] sm:$0x3f]
  %v58 = vld [vmem:[%s0 + $0xb1] sm:$0xff]
  %v59 = vld [vmem:[%s0 + $0xb9] sm:$0x3f]
  %v60 = vld [vmem:[%s0 + $0xc1] sm:$0xff]
  %v61 = vld [vmem:[%s0 + $0xc9] sm:$0x3f]
  %v62 = vld [vmem:[%s0 + $0xd1] sm:$0xff]
  %v63 = vld [vmem:[%s0 + $0xd9] sm:$0x3f]
  %v64 = vld [vmem:[%s0 + $0x2] sm:$0xff]
  %v65 = vld [vmem:[%s0 + $0xa] sm:$0x3f]
  %v66 = vld [vmem:[%s0 + $0x12] sm:$0xff]
  %v67 = vld [vmem:[%s0 + $0x1a] sm:$0x3f]
  %v68 = vld [vmem:[%s0 + $0x22] sm:$0xff]
  %v69 = vld [vmem:[%s0 + $0x2a] sm:$0x3f]
  %v70 = vld [vmem:[%s0 + $0x32] sm:$0xff]
  %v71 = vld [vmem:[%s0 + $0x3a] sm:$0x3f]
  %v72 = vld [vmem:[%s0 + $0x42] sm:$0xff]
  %v73 = vld [vmem:[%s0 + $0x4a] sm:$0x3f]
  %v74 = vld [vmem:[%s0 + $0x52] sm:$0xff]
  %v75 = vld [vmem:[%s0 + $0x5a] sm:$0x3f]
  %v76 = vld [vmem:[%s0 + $0x62] sm:$0xff]
  %v77 = vld [vmem:[%s0 + $0x6a] sm:$0x3f]
  %v78 = vld [vmem:[%s0 + $0x72] sm:$0xff]
  %v79 = vld [vmem:[%s0 + $0x7a] sm:$0x3f]
  %v80 = vld [vmem:[%s0 + $0x82] sm:$0xff]
  %v81 = vld [vmem:[%s0 + $0x8a] sm:$0x3f]
  %v82 = vld [vmem:[%s0 + $0x92] sm:$0xff]
  %v83 = vld [vmem:[%s0 + $0x9a] sm:$0x3f]
  %v84 = vld [vmem:[%s0 + $0xa2] sm:$0xff]
  %v85 = vld [vmem:[%s0 + $0xaa] sm:$0x3f]
  %v86 = vld [vmem:[%s0 + $0xb2] sm:$0xff]
  %v87 = vld [vmem:[%s0 + $0xba] sm:$0x3f]
  %v88 = vld [vmem:[%s0 + $0xc2] sm:$0xff]
  %v89 = vld [vmem:[%s0 + $0xca] sm:$0x3f]
  %v90 = vld [vmem:[%s0 + $0xd2] sm:$0xff]
  %v91 = vld [vmem:[%s0 + $0xda] sm:$0x3f]
  %s92 = scalar_lea.vmem %s0, 16
  %v93 = vld [vmem:[%s92] sm:$0xff]
  %v94 = vld [vmem:[%s92 + $0x8] sm:$0x3f]
  %v95 = vld [vmem:[%s92 + $0x10] sm:$0xff]
  %v96 = vld [vmem:[%s92 + $0x18] sm:$0x3f]
  %v97 = vld [vmem:[%s92 + $0x20] sm:$0xff]
  %v98 = vld [vmem:[%s92 + $0x28] sm:$0x3f]
  %v99 = vld [vmem:[%s92 + $0x30] sm:$0xff]
  %v100 = vld [vmem:[%s92 + $0x38] sm:$0x3f]
  %v101 = vld [vmem:[%s92 + $0x40] sm:$0xff]
  %v102 = vld [vmem:[%s92 + $0x48] sm:$0x3f]
  %v103 = vld [vmem:[%s92 + $0x50] sm:$0xff]
  %v104 = vld [vmem:[%s92 + $0x58] sm:$0x3f]
  %v105 = vld [vmem:[%s92 + $0x60] sm:$0xff]
  %v106 = vld [vmem:[%s92 + $0x68] sm:$0x3f]
  %v107 = vld [vmem:[%s92 + $0x70] sm:$0xff]
  %v108 = vld [vmem:[%s92 + $0x78] sm:$0x3f]
  %v109 = vld [vmem:[%s92 + $0x80] sm:$0xff]
  %v110 = vld [vmem:[%s92 + $0x88] sm:$0x3f]
  %v111 = vld [vmem:[%s92 + $0x90] sm:$0xff]
  %v112 = vld [vmem:[%s92 + $0x98] sm:$0x3f]
  %v113 = vld [vmem:[%s92 + $0xa0] sm:$0xff]
  %v114 = vld [vmem:[%s92 + $0xa8] sm:$0x3f]
  %v115 = vld [vmem:[%s92 + $0xb0] sm:$0xff]
  %v116 = vld [vmem:[%s92 + $0xb8] sm:$0x3f]
  %v117 = vld [vmem:[%s92 + $0xc0] sm:$0xff]
  %v118 = vld [vmem:[%s92 + $0xc8] sm:$0x3f]
  %v119 = vld [vmem:[%s92 + $0xd0] sm:$0xff]
  %v120 = vld [vmem:[%s92 + $0xd8] sm:$0x3f]
  %v121 = vld [vmem:[%s92 + $0x2] sm:$0xff]
  %v122 = vld [vmem:[%s92 + $0xa] sm:$0x3f]
  %v123 = vld [vmem:[%s92 + $0x12] sm:$0xff]
  %v124 = vld [vmem:[%s92 + $0x1a] sm:$0x3f]
  %v125 = vld [vmem:[%s92 + $0x22] sm:$0xff]
  %v126 = vld [vmem:[%s92 + $0x2a] sm:$0x3f]
  %v127 = vld [vmem:[%s92 + $0x32] sm:$0xff]
  %v128 = vld [vmem:[%s92 + $0x3a] sm:$0x3f]
  %v129 = vld [vmem:[%s92 + $0x42] sm:$0xff]
  %v130 = vld [vmem:[%s92 + $0x4a] sm:$0x3f]
  %v131 = vld [vmem:[%s92 + $0x52] sm:$0xff]
  %v132 = vld [vmem:[%s92 + $0x5a] sm:$0x3f]
  %v133 = vld [vmem:[%s92 + $0x62] sm:$0xff]
  %v134 = vld [vmem:[%s92 + $0x6a] sm:$0x3f]
  %v135 = vld [vmem:[%s92 + $0x72] sm:$0xff]
  %v136 = vld [vmem:[%s92 + $0x7a] sm:$0x3f]
  %v137 = vld [vmem:[%s92 + $0x82] sm:$0xff]
  %v138 = vld [vmem:[%s92 + $0x8a] sm:$0x3f]
  %v139 = vld [vmem:[%s92 + $0x92] sm:$0xff]
  %v140 = vld [vmem:[%s92 + $0x9a] sm:$0x3f]
  %v141 = vld [vmem:[%s92 + $0xa2] sm:$0xff]
  %v142 = vld [vmem:[%s92 + $0xaa] sm:$0x3f]
  %v143 = vld [vmem:[%s92 + $0xb2] sm:$0xff]
  %v144 = vld [vmem:[%s92 + $0xba] sm:$0x3f]
  %v145 = vld [vmem:[%s92 + $0xc2] sm:$0xff]
  %v146 = vld [vmem:[%s92 + $0xca] sm:$0x3f]
  %v147 = vld [vmem:[%s92 + $0xd2] sm:$0xff]
  %v148 = vld [vmem:[%s92 + $0xda] sm:$0x3f]
  %s149 = scalar_lea.vmem %s0, 32
  %v150 = vld [vmem:[%s149] sm:$0xff]
  %v151 = vld [vmem:[%s149 + $0x8] sm:$0x3f]
  %v152 = vld [vmem:[%s149 + $0x10] sm:$0xff]
  %v153 = vld [vmem:[%s149 + $0x18] sm:$0x3f]
  %v154 = vld [vmem:[%s149 + $0x20] sm:$0xff]
  %v155 = vld [vmem:[%s149 + $0x28] sm:$0x3f]
  %v156 = vld [vmem:[%s149 + $0x30] sm:$0xff]
  %v157 = vld [vmem:[%s149 + $0x38] sm:$0x3f]
  %v158 = vld [vmem:[%s149 + $0x40] sm:$0xff]
  %v159 = vld [vmem:[%s149 + $0x48] sm:$0x3f]
  %v160 = vld [vmem:[%s149 + $0x50] sm:$0xff]
  %v161 = vld [vmem:[%s149 + $0x58] sm:$0x3f]
  %v162 = vld [vmem:[%s149 + $0x60] sm:$0xff]
  %v163 = vld [vmem:[%s149 + $0x68] sm:$0x3f]
  %v164 = vld [vmem:[%s149 + $0x70] sm:$0xff]
  %v165 = vld [vmem:[%s149 + $0x78] sm:$0x3f]
  %v166 = vld [vmem:[%s149 + $0x80] sm:$0xff]
  %v167 = vld [vmem:[%s149 + $0x88] sm:$0x3f]
  %v168 = vld [vmem:[%s149 + $0x90] sm:$0xff]
  %v169 = vld [vmem:[%s149 + $0x98] sm:$0x3f]
  %v170 = vld [vmem:[%s149 + $0xa0] sm:$0xff]
  %v171 = vld [vmem:[%s149 + $0xa8] sm:$0x3f]
  %v172 = vld [vmem:[%s149 + $0xb0] sm:$0xff]
  %v173 = vld [vmem:[%s149 + $0xb8] sm:$0x3f]
  %v174 = vld [vmem:[%s149 + $0xc0] sm:$0xff]
  %v175 = vld [vmem:[%s149 + $0xc8] sm:$0x3f]
  %v176 = vld [vmem:[%s149 + $0xd0] sm:$0xff]
  %v177 = vld [vmem:[%s149 + $0xd8] sm:$0x3f]
  %v178 = vld [vmem:[%s149 + $0x1] sm:$0xff]
  %v179 = vld [vmem:[%s149 + $0x9] sm:$0x3f]
  %v180 = vld [vmem:[%s149 + $0x11] sm:$0xff]
  %v181 = vld [vmem:[%s149 + $0x19] sm:$0x3f]
  %v182 = vld [vmem:[%s149 + $0x21] sm:$0xff]
  %v183 = vld [vmem:[%s149 + $0x29] sm:$0x3f]
  %v184 = vld [vmem:[%s149 + $0x31] sm:$0xff]
  %v185 = vld [vmem:[%s149 + $0x39] sm:$0x3f]
  %v186 = vld [vmem:[%s149 + $0x41] sm:$0xff]
  %v187 = vld [vmem:[%s149 + $0x49] sm:$0x3f]
  %v188 = vld [vmem:[%s149 + $0x51] sm:$0xff]
  %v189 = vld [vmem:[%s149 + $0x59] sm:$0x3f]
  %v190 = vld [vmem:[%s149 + $0x61] sm:$0xff]
  %v191 = vld [vmem:[%s149 + $0x69] sm:$0x3f]
  %v192 = vld [vmem:[%s149 + $0x71] sm:$0xff]
  %v193 = vld [vmem:[%s149 + $0x79] sm:$0x3f]
  %v194 = vld [vmem:[%s149 + $0x81] sm:$0xff]
  %v195 = vld [vmem:[%s149 + $0x89] sm:$0x3f]
  %v196 = vld [vmem:[%s149 + $0x91] sm:$0xff]
  %v197 = vld [vmem:[%s149 + $0x99] sm:$0x3f]
  %v198 = vld [vmem:[%s149 + $0xa1] sm:$0xff]
  %v199 = vld [vmem:[%s149 + $0xa9] sm:$0x3f]
  %v200 = vld [vmem:[%s149 + $0xb1] sm:$0xff]
  %v201 = vld [vmem:[%s149 + $0xb9] sm:$0x3f]
  %v202 = vld [vmem:[%s149 + $0xc1] sm:$0xff]
  %v203 = vld [vmem:[%s149 + $0xc9] sm:$0x3f]
  %v204 = vld [vmem:[%s149 + $0xd1] sm:$0xff]
  %v205 = vld [vmem:[%s149 + $0xd9] sm:$0x3f]
  %v206 = vld [vmem:[%s149 + $0x2] sm:$0xff]
  %v207 = vld [vmem:[%s149 + $0xa] sm:$0x3f]
  %v208 = vld [vmem:[%s149 + $0x12] sm:$0xff]
  %v209 = vld [vmem:[%s149 + $0x1a] sm:$0x3f]
  %v210 = vld [vmem:[%s149 + $0x22] sm:$0xff]
  %v211 = vld [vmem:[%s149 + $0x2a] sm:$0x3f]
  %v212 = vld [vmem:[%s149 + $0x32] sm:$0xff]
  %v213 = vld [vmem:[%s149 + $0x3a] sm:$0x3f]
  %v214 = vld [vmem:[%s149 + $0x42] sm:$0xff]
  %v215 = vld [vmem:[%s149 + $0x4a] sm:$0x3f]
  %v216 = vld [vmem:[%s149 + $0x52] sm:$0xff]
  %v217 = vld [vmem:[%s149 + $0x5a] sm:$0x3f]
  %v218 = vld [vmem:[%s149 + $0x62] sm:$0xff]
  %v219 = vld [vmem:[%s149 + $0x6a] sm:$0x3f]
  %v220 = vld [vmem:[%s149 + $0x72] sm:$0xff]
  %v221 = vld [vmem:[%s149 + $0x7a] sm:$0x3f]
  %v222 = vld [vmem:[%s149 + $0x82] sm:$0xff]
  %v223 = vld [vmem:[%s149 + $0x8a] sm:$0x3f]
  %v224 = vld [vmem:[%s149 + $0x92] sm:$0xff]
  %v225 = vld [vmem:[%s149 + $0x9a] sm:$0x3f]
  %v226 = vld [vmem:[%s149 + $0xa2] sm:$0xff]
  %v227 = vld [vmem:[%s149 + $0xaa] sm:$0x3f]
  %v228 = vld [vmem:[%s149 + $0xb2] sm:$0xff]
  %v229 = vld [vmem:[%s149 + $0xba] sm:$0x3f]
  %v230 = vld [vmem:[%s149 + $0xc2] sm:$0xff]
  %v231 = vld [vmem:[%s149 + $0xca] sm:$0x3f]
  %v232 = vld [vmem:[%s149 + $0xd2] sm:$0xff]
  %v233 = vld [vmem:[%s149 + $0xda] sm:$0x3f]
  %v234 = vsub.f32 %v64, %v8
  %v235 = vsub.f32 %v65, %v9
  %v236 = vsub.f32 %v66, %v10
  %v237 = vsub.f32 %v67, %v11
  %v238 = vsub.f32 %v68, %v12
  %v239 = vsub.f32 %v69, %v13
  %v240 = vsub.f32 %v70, %v14
  %v241 = vsub.f32 %v71, %v15
  %v242 = vsub.f32 %v72, %v16
  %v243 = vsub.f32 %v73, %v17
  %v244 = vsub.f32 %v74, %v18
  %v245 = vsub.f32 %v75, %v19
  %v246 = vsub.f32 %v76, %v20
  %v247 = vsub.f32 %v77, %v21
  %v248 = vsub.f32 %v78, %v22
  %v249 = vsub.f32 %v79, %v23
  %v250 = vsub.f32 %v80, %v24
  %v251 = vsub.f32 %v81, %v25
  %v252 = vsub.f32 %v82, %v26
  %v253 = vsub.f32 %v83, %v27
  %v254 = vsub.f32 %v84, %v28
  %v255 = vsub.f32 %v85, %v29
  %v256 = vsub.f32 %v86, %v30
  %v257 = vsub.f32 %v87, %v31
  %v258 = vsub.f32 %v88, %v32
  %v259 = vsub.f32 %v89, %v33
  %v260 = vsub.f32 %v90, %v34
  %v261 = vsub.f32 %v91, %v35
  %v262 = vsub.f32 %v121, %v93
  %v263 = vsub.f32 %v122, %v94
  %v264 = vsub.f32 %v123, %v95
  %v265 = vsub.f32 %v124, %v96
  %v266 = vsub.f32 %v125, %v97
  %v267 = vsub.f32 %v126, %v98
  %v268 = vsub.f32 %v127, %v99
  %v269 = vsub.f32 %v128, %v100
  %v270 = vsub.f32 %v129, %v101
  %v271 = vsub.f32 %v130, %v102
  %v272 = vsub.f32 %v131, %v103
  %v273 = vsub.f32 %v132, %v104
  %v274 = vsub.f32 %v133, %v105
  %v275 = vsub.f32 %v134, %v106
  %v276 = vsub.f32 %v135, %v107
  %v277 = vsub.f32 %v136, %v108
  %v278 = vsub.f32 %v137, %v109
  %v279 = vsub.f32 %v138, %v110
  %v280 = vsub.f32 %v139, %v111
  %v281 = vsub.f32 %v140, %v112
  %v282 = vsub.f32 %v141, %v113
  %v283 = vsub.f32 %v142, %v114
  %v284 = vsub.f32 %v143, %v115
  %v285 = vsub.f32 %v144, %v116
  %v286 = vsub.f32 %v145, %v117
  %v287 = vsub.f32 %v146, %v118
  %v288 = vsub.f32 %v147, %v119
  %v289 = vsub.f32 %v148, %v120
  %v290 = vmul.f32 %v262, 2.0
  %v291 = vmul.f32 %v263, 2.0
  %v292 = vmul.f32 %v264, 2.0
  %v293 = vmul.f32 %v265, 2.0
  %v294 = vmul.f32 %v266, 2.0
  %v295 = vmul.f32 %v267, 2.0
  %v296 = vmul.f32 %v268, 2.0
  %v297 = vmul.f32 %v269, 2.0
  %v298 = vmul.f32 %v270, 2.0
  %v299 = vmul.f32 %v271, 2.0
  %v300 = vmul.f32 %v272, 2.0
  %v301 = vmul.f32 %v273, 2.0
  %v302 = vmul.f32 %v274, 2.0
  %v303 = vmul.f32 %v275, 2.0
  %v304 = vmul.f32 %v276, 2.0
  %v305 = vmul.f32 %v277, 2.0
  %v306 = vmul.f32 %v278, 2.0
  %v307 = vmul.f32 %v279, 2.0
  %v308 = vmul.f32 %v280, 2.0
  %v309 = vmul.f32 %v281, 2.0
  %v310 = vmul.f32 %v282, 2.0
  %v311 = vmul.f32 %v283, 2.0
  %v312 = vmul.f32 %v284, 2.0
  %v313 = vmul.f32 %v285, 2.0
  %v314 = vmul.f32 %v286, 2.0
  %v315 = vmul.f32 %v287, 2.0
  %v316 = vmul.f32 %v288, 2.0
  %v317 = vmul.f32 %v289, 2.0
  %v318 = vadd.f32 %v234, %v290
  %v319 = vadd.f32 %v235, %v291
  %v320 = vadd.f32 %v236, %v292
  %v321 = vadd.f32 %v237, %v293
  %v322 = vadd.f32 %v238, %v294
  %v323 = vadd.f32 %v239, %v295
  %v324 = vadd.f32 %v240, %v296
  %v325 = vadd.f32 %v241, %v297
  %v326 = vadd.f32 %v242, %v298
  %v327 = vadd.f32 %v243, %v299
  %v328 = vadd.f32 %v244, %v300
  %v329 = vadd.f32 %v245, %v301
  %v330 = vadd.f32 %v246, %v302
  %v331 = vadd.f32 %v247, %v303
  %v332 = vadd.f32 %v248, %v304
  %v333 = vadd.f32 %v249, %v305
  %v334 = vadd.f32 %v250, %v306
  %v335 = vadd.f32 %v251, %v307
  %v336 = vadd.f32 %v252, %v308
  %v337 = vadd.f32 %v253, %v309
  %v338 = vadd.f32 %v254, %v310
  %v339 = vadd.f32 %v255, %v311
  %v340 = vadd.f32 %v256, %v312
  %v341 = vadd.f32 %v257, %v313
  %v342 = vadd.f32 %v258, %v314
  %v343 = vadd.f32 %v259, %v315
  %v344 = vadd.f32 %v260, %v316
  %v345 = vadd.f32 %v261, %v317
  %v346 = vsub.f32 %v206, %v150
  %v347 = vsub.f32 %v207, %v151
  %v348 = vsub.f32 %v208, %v152
  %v349 = vsub.f32 %v209, %v153
  %v350 = vsub.f32 %v210, %v154
  %v351 = vsub.f32 %v211, %v155
  %v352 = vsub.f32 %v212, %v156
  %v353 = vsub.f32 %v213, %v157
  %v354 = vsub.f32 %v214, %v158
  %v355 = vsub.f32 %v215, %v159
  %v356 = vsub.f32 %v216, %v160
  %v357 = vsub.f32 %v217, %v161
  %v358 = vsub.f32 %v218, %v162
  %v359 = vsub.f32 %v219, %v163
  %v360 = vsub.f32 %v220, %v164
  %v361 = vsub.f32 %v221, %v165
  %v362 = vsub.f32 %v222, %v166
  %v363 = vsub.f32 %v223, %v167
  %v364 = vsub.f32 %v224, %v168
  %v365 = vsub.f32 %v225, %v169
  %v366 = vsub.f32 %v226, %v170
  %v367 = vsub.f32 %v227, %v171
  %v368 = vsub.f32 %v228, %v172
  %v369 = vsub.f32 %v229, %v173
  %v370 = vsub.f32 %v230, %v174
  %v371 = vsub.f32 %v231, %v175
  %v372 = vsub.f32 %v232, %v176
  %v373 = vsub.f32 %v233, %v177
  %v374 = vadd.f32 %v318, %v346
  %v375 = vadd.f32 %v319, %v347
  %v376 = vadd.f32 %v320, %v348
  %v377 = vadd.f32 %v321, %v349
  %v378 = vadd.f32 %v322, %v350
  %v379 = vadd.f32 %v323, %v351
  %v380 = vadd.f32 %v324, %v352
  %v381 = vadd.f32 %v325, %v353
  %v382 = vadd.f32 %v326, %v354
  %v383 = vadd.f32 %v327, %v355
  %v384 = vadd.f32 %v328, %v356
  %v385 = vadd.f32 %v329, %v357
  %v386 = vadd.f32 %v330, %v358
  %v387 = vadd.f32 %v331, %v359
  %v388 = vadd.f32 %v332, %v360
  %v389 = vadd.f32 %v333, %v361
  %v390 = vadd.f32 %v334, %v362
  %v391 = vadd.f32 %v335, %v363
  %v392 = vadd.f32 %v336, %v364
  %v393 = vadd.f32 %v337, %v365
  %v394 = vadd.f32 %v338, %v366
  %v395 = vadd.f32 %v339, %v367
  %v396 = vadd.f32 %v340, %v368
  %v397 = vadd.f32 %v341, %v369
  %v398 = vadd.f32 %v342, %v370
  %v399 = vadd.f32 %v343, %v371
  %v400 = vadd.f32 %v344, %v372
  %v401 = vadd.f32 %v345, %v373
  %v402 = vsub.f32 %v8, %v150
  %v403 = vsub.f32 %v9, %v151
  %v404 = vsub.f32 %v10, %v152
  %v405 = vsub.f32 %v11, %v153
  %v406 = vsub.f32 %v12, %v154
  %v407 = vsub.f32 %v13, %v155
  %v408 = vsub.f32 %v14, %v156
  %v409 = vsub.f32 %v15, %v157
  %v410 = vsub.f32 %v16, %v158
  %v411 = vsub.f32 %v17, %v159
  %v412 = vsub.f32 %v18, %v160
  %v413 = vsub.f32 %v19, %v161
  %v414 = vsub.f32 %v20, %v162
  %v415 = vsub.f32 %v21, %v163
  %v416 = vsub.f32 %v22, %v164
  %v417 = vsub.f32 %v23, %v165
  %v418 = vsub.f32 %v24, %v166
  %v419 = vsub.f32 %v25, %v167
  %v420 = vsub.f32 %v26, %v168
  %v421 = vsub.f32 %v27, %v169
  %v422 = vsub.f32 %v28, %v170
  %v423 = vsub.f32 %v29, %v171
  %v424 = vsub.f32 %v30, %v172
  %v425 = vsub.f32 %v31, %v173
  %v426 = vsub.f32 %v32, %v174
  %v427 = vsub.f32 %v33, %v175
  %v428 = vsub.f32 %v34, %v176
  %v429 = vsub.f32 %v35, %v177
  %v430 = vsub.f32 %v36, %v178
  %v431 = vsub.f32 %v37, %v179
  %v432 = vsub.f32 %v38, %v180
  %v433 = vsub.f32 %v39, %v181
  %v434 = vsub.f32 %v40, %v182
  %v435 = vsub.f32 %v41, %v183
  %v436 = vsub.f32 %v42, %v184
  %v437 = vsub.f32 %v43, %v185
  %v438 = vsub.f32 %v44, %v186
  %v439 = vsub.f32 %v45, %v187
  %v440 = vsub.f32 %v46, %v188
  %v441 = vsub.f32 %v47, %v189
  %v442 = vsub.f32 %v48, %v190
  %v443 = vsub.f32 %v49, %v191
  %v444 = vsub.f32 %v50, %v192
  %v445 = vsub.f32 %v51, %v193
  %v446 = vsub.f32 %v52, %v194
  %v447 = vsub.f32 %v53, %v195
  %v448 = vsub.f32 %v54, %v196
  %v449 = vsub.f32 %v55, %v197
  %v450 = vsub.f32 %v56, %v198
  %v451 = vsub.f32 %v57, %v199
  %v452 = vsub.f32 %v58, %v200
  %v453 = vsub.f32 %v59, %v201
  %v454 = vsub.f32 %v60, %v202
  %v455 = vsub.f32 %v61, %v203
  %v456 = vsub.f32 %v62, %v204
  %v457 = vsub.f32 %v63, %v205
  %v458 = vmul.f32 %v430, 2.0
  %v459 = vmul.f32 %v431, 2.0
  %v460 = vmul.f32 %v432, 2.0
  %v461 = vmul.f32 %v433, 2.0
  %v462 = vmul.f32 %v434, 2.0
  %v463 = vmul.f32 %v435, 2.0
  %v464 = vmul.f32 %v436, 2.0
  %v465 = vmul.f32 %v437, 2.0
  %v466 = vmul.f32 %v438, 2.0
  %v467 = vmul.f32 %v439, 2.0
  %v468 = vmul.f32 %v440, 2.0
  %v469 = vmul.f32 %v441, 2.0
  %v470 = vmul.f32 %v442, 2.0
  %v471 = vmul.f32 %v443, 2.0
  %v472 = vmul.f32 %v444, 2.0
  %v473 = vmul.f32 %v445, 2.0
  %v474 = vmul.f32 %v446, 2.0
  %v475 = vmul.f32 %v447, 2.0
  %v476 = vmul.f32 %v448, 2.0
  %v477 = vmul.f32 %v449, 2.0
  %v478 = vmul.f32 %v450, 2.0
  %v479 = vmul.f32 %v451, 2.0
  %v480 = vmul.f32 %v452, 2.0
  %v481 = vmul.f32 %v453, 2.0
  %v482 = vmul.f32 %v454, 2.0
  %v483 = vmul.f32 %v455, 2.0
  %v484 = vmul.f32 %v456, 2.0
  %v485 = vmul.f32 %v457, 2.0
  %v486 = vadd.f32 %v402, %v458
  %v487 = vadd.f32 %v403, %v459
  %v488 = vadd.f32 %v404, %v460
  %v489 = vadd.f32 %v405, %v461
  %v490 = vadd.f32 %v406, %v462
  %v491 = vadd.f32 %v407, %v463
  %v492 = vadd.f32 %v408, %v464
  %v493 = vadd.f32 %v409, %v465
  %v494 = vadd.f32 %v410, %v466
  %v495 = vadd.f32 %v411, %v467
  %v496 = vadd.f32 %v412, %v468
  %v497 = vadd.f32 %v413, %v469
  %v498 = vadd.f32 %v414, %v470
  %v499 = vadd.f32 %v415, %v471
  %v500 = vadd.f32 %v416, %v472
  %v501 = vadd.f32 %v417, %v473
  %v502 = vadd.f32 %v418, %v474
  %v503 = vadd.f32 %v419, %v475
  %v504 = vadd.f32 %v420, %v476
  %v505 = vadd.f32 %v421, %v477
  %v506 = vadd.f32 %v422, %v478
  %v507 = vadd.f32 %v423, %v479
  %v508 = vadd.f32 %v424, %v480
  %v509 = vadd.f32 %v425, %v481
  %v510 = vadd.f32 %v426, %v482
  %v511 = vadd.f32 %v427, %v483
  %v512 = vadd.f32 %v428, %v484
  %v513 = vadd.f32 %v429, %v485
  %v514 = vsub.f32 %v64, %v206
  %v515 = vsub.f32 %v65, %v207
  %v516 = vsub.f32 %v66, %v208
  %v517 = vsub.f32 %v67, %v209
  %v518 = vsub.f32 %v68, %v210
  %v519 = vsub.f32 %v69, %v211
  %v520 = vsub.f32 %v70, %v212
  %v521 = vsub.f32 %v71, %v213
  %v522 = vsub.f32 %v72, %v214
  %v523 = vsub.f32 %v73, %v215
  %v524 = vsub.f32 %v74, %v216
  %v525 = vsub.f32 %v75, %v217
  %v526 = vsub.f32 %v76, %v218
  %v527 = vsub.f32 %v77, %v219
  %v528 = vsub.f32 %v78, %v220
  %v529 = vsub.f32 %v79, %v221
  %v530 = vsub.f32 %v80, %v222
  %v531 = vsub.f32 %v81, %v223
  %v532 = vsub.f32 %v82, %v224
  %v533 = vsub.f32 %v83, %v225
  %v534 = vsub.f32 %v84, %v226
  %v535 = vsub.f32 %v85, %v227
  %v536 = vsub.f32 %v86, %v228
  %v537 = vsub.f32 %v87, %v229
  %v538 = vsub.f32 %v88, %v230
  %v539 = vsub.f32 %v89, %v231
  %v540 = vsub.f32 %v90, %v232
  %v541 = vsub.f32 %v91, %v233
  %v542 = vadd.f32 %v486, %v514
  %v543 = vadd.f32 %v487, %v515
  %v544 = vadd.f32 %v488, %v516
  %v545 = vadd.f32 %v489, %v517
  %v546 = vadd.f32 %v490, %v518
  %v547 = vadd.f32 %v491, %v519
  %v548 = vadd.f32 %v492, %v520
  %v549 = vadd.f32 %v493, %v521
  %v550 = vadd.f32 %v494, %v522
  %v551 = vadd.f32 %v495, %v523
  %v552 = vadd.f32 %v496, %v524
  %v553 = vadd.f32 %v497, %v525
  %v554 = vadd.f32 %v498, %v526
  %v555 = vadd.f32 %v499, %v527
  %v556 = vadd.f32 %v500, %v528
  %v557 = vadd.f32 %v501, %v529
  %v558 = vadd.f32 %v502, %v530
  %v559 = vadd.f32 %v503, %v531
  %v560 = vadd.f32 %v504, %v532
  %v561 = vadd.f32 %v505, %v533
  %v562 = vadd.f32 %v506, %v534
  %v563 = vadd.f32 %v507, %v535
  %v564 = vadd.f32 %v508, %v536
  %v565 = vadd.f32 %v509, %v537
  %v566 = vadd.f32 %v510, %v538
  %v567 = vadd.f32 %v511, %v539
  %v568 = vadd.f32 %v512, %v540
  %v569 = vadd.f32 %v513, %v541
  %v570 = vand.u32 2147483647, %v374
  %v571 = vand.u32 2147483647, %v375
  %v572 = vand.u32 2147483647, %v376
  %v573 = vand.u32 2147483647, %v377
  %v574 = vand.u32 2147483647, %v378
  %v575 = vand.u32 2147483647, %v379
  %v576 = vand.u32 2147483647, %v380
  %v577 = vand.u32 2147483647, %v381
  %v578 = vand.u32 2147483647, %v382
  %v579 = vand.u32 2147483647, %v383
  %v580 = vand.u32 2147483647, %v384
  %v581 = vand.u32 2147483647, %v385
  %v582 = vand.u32 2147483647, %v386
  %v583 = vand.u32 2147483647, %v387
  %v584 = vand.u32 2147483647, %v388
  %v585 = vand.u32 2147483647, %v389
  %v586 = vand.u32 2147483647, %v390
  %v587 = vand.u32 2147483647, %v391
  %v588 = vand.u32 2147483647, %v392
  %v589 = vand.u32 2147483647, %v393
  %v590 = vand.u32 2147483647, %v394
  %v591 = vand.u32 2147483647, %v395
  %v592 = vand.u32 2147483647, %v396
  %v593 = vand.u32 2147483647, %v397
  %v594 = vand.u32 2147483647, %v398
  %v595 = vand.u32 2147483647, %v399
  %v596 = vand.u32 2147483647, %v400
  %v597 = vand.u32 2147483647, %v401
  %v598 = vand.u32 2147483647, %v542
  %v599 = vand.u32 2147483647, %v543
  %v600 = vand.u32 2147483647, %v544
  %v601 = vand.u32 2147483647, %v545
  %v602 = vand.u32 2147483647, %v546
  %v603 = vand.u32 2147483647, %v547
  %v604 = vand.u32 2147483647, %v548
  %v605 = vand.u32 2147483647, %v549
  %v606 = vand.u32 2147483647, %v550
  %v607 = vand.u32 2147483647, %v551
  %v608 = vand.u32 2147483647, %v552
  %v609 = vand.u32 2147483647, %v553
  %v610 = vand.u32 2147483647, %v554
  %v611 = vand.u32 2147483647, %v555
  %v612 = vand.u32 2147483647, %v556
  %v613 = vand.u32 2147483647, %v557
  %v614 = vand.u32 2147483647, %v558
  %v615 = vand.u32 2147483647, %v559
  %v616 = vand.u32 2147483647, %v560
  %v617 = vand.u32 2147483647, %v561
  %v618 = vand.u32 2147483647, %v562
  %v619 = vand.u32 2147483647, %v563
  %v620 = vand.u32 2147483647, %v564
  %v621 = vand.u32 2147483647, %v565
  %v622 = vand.u32 2147483647, %v566
  %v623 = vand.u32 2147483647, %v567
  %v624 = vand.u32 2147483647, %v568
  %v625 = vand.u32 2147483647, %v569
  %v626 = vadd.f32 %v570, %v598
  %v627 = vadd.f32 %v571, %v599
  %v628 = vadd.f32 %v572, %v600
  %v629 = vadd.f32 %v573, %v601
  %v630 = vadd.f32 %v574, %v602
  %v631 = vadd.f32 %v575, %v603
  %v632 = vadd.f32 %v576, %v604
  %v633 = vadd.f32 %v577, %v605
  %v634 = vadd.f32 %v578, %v606
  %v635 = vadd.f32 %v579, %v607
  %v636 = vadd.f32 %v580, %v608
  %v637 = vadd.f32 %v581, %v609
  %v638 = vadd.f32 %v582, %v610
  %v639 = vadd.f32 %v583, %v611
  %v640 = vadd.f32 %v584, %v612
  %v641 = vadd.f32 %v585, %v613
  %v642 = vadd.f32 %v586, %v614
  %v643 = vadd.f32 %v587, %v615
  %v644 = vadd.f32 %v588, %v616
  %v645 = vadd.f32 %v589, %v617
  %v646 = vadd.f32 %v590, %v618
  %v647 = vadd.f32 %v591, %v619
  %v648 = vadd.f32 %v592, %v620
  %v649 = vadd.f32 %v593, %v621
  %v650 = vadd.f32 %v594, %v622
  %v651 = vadd.f32 %v595, %v623
  %v652 = vadd.f32 %v596, %v624
  %v653 = vadd.f32 %v597, %v625
  %654 = vst [vmem:[%s1] sm:$0xff] %v626
  %655 = vst [vmem:[%s1 + $0x8] sm:$0x3f] %v627
  %656 = vst [vmem:[%s1 + $0x10] sm:$0xff] %v628
  %657 = vst [vmem:[%s1 + $0x18] sm:$0x3f] %v629
  %658 = vst [vmem:[%s1 + $0x20] sm:$0xff] %v630
  %659 = vst [vmem:[%s1 + $0x28] sm:$0x3f] %v631
  %660 = vst [vmem:[%s1 + $0x30] sm:$0xff] %v632
  %661 = vst [vmem:[%s1 + $0x38] sm:$0x3f] %v633
  %662 = vst [vmem:[%s1 + $0x40] sm:$0xff] %v634
  %663 = vst [vmem:[%s1 + $0x48] sm:$0x3f] %v635
  %664 = vst [vmem:[%s1 + $0x50] sm:$0xff] %v636
  %665 = vst [vmem:[%s1 + $0x58] sm:$0x3f] %v637
  %666 = vst [vmem:[%s1 + $0x60] sm:$0xff] %v638
  %667 = vst [vmem:[%s1 + $0x68] sm:$0x3f] %v639
  %668 = vst [vmem:[%s1 + $0x70] sm:$0xff] %v640
  %669 = vst [vmem:[%s1 + $0x78] sm:$0x3f] %v641
  %670 = vst [vmem:[%s1 + $0x80] sm:$0xff] %v642
  %671 = vst [vmem:[%s1 + $0x88] sm:$0x3f] %v643
  %672 = vst [vmem:[%s1 + $0x90] sm:$0xff] %v644
  %673 = vst [vmem:[%s1 + $0x98] sm:$0x3f] %v645
  %674 = vst [vmem:[%s1 + $0xa0] sm:$0xff] %v646
  %675 = vst [vmem:[%s1 + $0xa8] sm:$0x3f] %v647
  %676 = vst [vmem:[%s1 + $0xb0] sm:$0xff] %v648
  %677 = vst [vmem:[%s1 + $0xb8] sm:$0x3f] %v649
  %678 = vst [vmem:[%s1 + $0xc0] sm:$0xff] %v650
  %679 = vst [vmem:[%s1 + $0xc8] sm:$0x3f] %v651
  %680 = vst [vmem:[%s1 + $0xd0] sm:$0xff] %v652
  %681 = vst [vmem:[%s1 + $0xd8] sm:$0x3f] %v653
  // Predicated region
  $region6: #{gradient_sobel.1} parent=0 // pred_check
    _
  $region7: #{gradient_sobel.1} parent=0 // pred_check_branch
    %683 = sbr.rel (0) target = $region9
  $region8: #{gradient_sobel.1} parent=0 // pred_region
    _
  $region9: #{gradient_sobel.1} parent=0 // pred_fallthru
    _
  // Predicated region
  $region10: #{gradient_sobel.1} parent=0 // pred_check
    _
  $region11: #{gradient_sobel.1} parent=0 // pred_check_branch
    %685 = sbr.rel (0) target = $region13
  $region12: #{gradient_sobel.1} parent=0 // pred_region
    _
  $region13: #{gradient_sobel.1} parent=0 // pred_fallthru
    _

</llo_original>
